<compile_context>
chip_gen: v7x
topology: tpu7x:2x2x1
jax: 0.10.0
libtpu: 0.0.40
codegen_flags: <defaults>
</compile_context>

<pallas_src>
import functools
import math

import jax
import jax.numpy as jnp
from jax import lax
from jax.experimental import pallas as pl
from jax.experimental.pallas import tpu as pltpu


# Finite "minus infinity": exp() underflows to exactly 0.0, and 0.0 * finite
# stays 0.0 (a true -inf would give 0 * -inf = NaN in the masked loss terms).
_NEG_INF = -1e30


def sdm_kernel(v_ref, t_ref, lab_col_ref, lab_row_ref, logm_ref, out_ref,
               *, n_valid, block_rows, log_eps):
    """One row-block of both KL directions; writes a partial loss (already /B).

    v_ref / t_ref: (Bp, Dp) bf16, already L2-normalized; the image rows also
    already carry the logit scale.
    """
    i = pl.program_id(0)
    TB = block_rows
    Bp = v_ref.shape[0]
    base = pl.multiple_of(i * TB, TB)

    # --- query rows for this block; keys are the full resident arrays --------
    keys_img = v_ref[...]
    keys_txt = t_ref[...]
    if TB == Bp:            # single row-block: queries are exactly the keys
        q_img, q_txt = keys_img, keys_txt
    else:
        q_img = v_ref[pl.ds(base, TB), :]
        q_txt = t_ref[pl.ds(base, TB), :]

    # --- cosine logits: both directions as bf16 MXU matmuls (f32 accumulate),
    #     contracting dim 1 of both operands (A @ B.T without an XLU transpose)
    dn = (((1,), (1,)), ((), ()))
    # rows of vision_proj_text = logit_scale * image_norm @ text_norm.T
    i2t = lax.dot_general(q_img, keys_txt, dimension_numbers=dn,
                          preferred_element_type=jnp.float32)
    # rows of text_proj_image = logit_scale * text_norm @ image_norm.T
    t2i = lax.dot_general(q_txt, keys_img, dimension_numbers=dn,
                          preferred_element_type=jnp.float32)

    # Padded key columns get exactly zero softmax weight (n_valid is static,
    # so this masking vanishes entirely when there is no batch padding).
    if n_valid < Bp:
        col_ids = lax.broadcasted_iota(jnp.int32, (1, Bp), 1)
        col_valid = col_ids < n_valid
        i2t = jnp.where(col_valid, i2t, _NEG_INF)
        t2i = jnp.where(col_valid, t2i, _NEG_INF)

    # --- log(labels_distribute + eps) for this row block ---------------------
    # Per-column log(1/rowsum + eps) was hoisted to the wrapper (logm_ref);
    # here it's a single (TB, Bp) compare + select.
    match_blk = lab_col_ref[...] == lab_row_ref[...]            # (TB, Bp) bool
    log_lbl = jnp.where(match_blk, logm_ref[...], log_eps)      # (TB, Bp)

    # --- fused softmax-KL reduction: per-row scalars, exact normalization ----
    def kl_rows(x):
        m = jnp.max(x, axis=1, keepdims=True)
        xm = x - m
        e = jnp.exp(xm)
        s = jnp.sum(e, axis=1, keepdims=True)                   # >= 1
        num = jnp.sum(e * (xm - log_lbl), axis=1, keepdims=True)
        # sum_j softmax_j * (log_softmax_j - log_lbl_j)
        return num / s - jnp.log(s)                             # (TB, 1)

    loss_rows = kl_rows(i2t) + kl_rows(t2i)
    if n_valid < Bp:                                            # drop padded rows
        row_ids = lax.broadcasted_iota(jnp.int32, (TB, 1), 0) + base
        loss_rows = loss_rows * (row_ids < n_valid).astype(jnp.float32)

    partial = jnp.sum(loss_rows) / n_valid                      # already /B
    out_ref[...] = jnp.broadcast_to(partial, out_ref.shape)


def _round_up(x, m):
    return ((x + m - 1) // m) * m


def _device_kind():
    try:
        return jax.devices()[0].device_kind.lower()
    except Exception:  # no device / unusual backend: fall back to conservative
        return ""


def sdm_loss(vision_features, text_features, labels, length, epsilon=1e-8):
    """Pallas SDM loss. vision/text: (B, D); labels: (B,) or (B, 1); length: logit scale."""
    B, D = vision_features.shape
    f32 = jnp.float32

    # ---- hoisted prep (cheap mem-bound XLA; keeps the kernel MXU/VPU-lean) ---
    v = vision_features.astype(f32)
    t = text_features.astype(f32)
    image_norm = v / jnp.linalg.norm(v, axis=1, keepdims=True)
    text_norm = t / jnp.linalg.norm(t, axis=1, keepdims=True)
    scale = jnp.asarray(length, f32)
    # Fold the logit scale into the (single) image operand: it scales both
    # similarity directions, so no per-logit scaling is needed in the kernel.
    img_bf = (image_norm * scale).astype(jnp.bfloat16)
    txt_bf = text_norm.astype(jnp.bfloat16)

    # Label distribution, hoisted: log(labels_distribute + eps) is
    # log(1/rowsum + eps) where labels match, log(eps) elsewhere.  The match
    # matrix is symmetric (equality-derived), so row-sums == column-sums and
    # the per-column value equals PyTorch's column-wise division.
    lab = labels.astype(f32).reshape(B, 1)
    match = (lab == lab.T).astype(f32)                               # (B, B)
    log_match_vals = jnp.log(1.0 / jnp.sum(match, axis=1) + epsilon)  # (B,)
    log_eps = float(math.log(epsilon))

    # ---- tile-size selection --------------------------------------------------
    Dp = _round_up(max(D, 128), 128)
    kind = _device_kind()
    # v7x has 64 MiB VMEM per TensorCore; v5e/v6e have 128 MiB.
    vmem_cap = (60 if "v7" in kind else 100) * 1024 * 1024

    if B <= 16:
        Bp, TB = 16, 16                       # bf16 sublane tile is 16
    elif B <= 128:
        # >=2 row blocks so both v7x TensorCores get work on small batches;
        # Bp multiple of 32 keeps TB a multiple of the bf16 sublane tile.
        Bp = _round_up(B, 32)
        TB = Bp // 2
    else:
        # v6e: 2x256^2 MXU tile and 128 MiB VMEM -> prefer TB=256 when it fits.
        # Keep TB=128 on v7x (64 MiB VMEM) and v5e (4x128^2 MXU).
        TB = 256 if ("v6" in kind and B > 256) else 128
        Bp = _round_up(B, TB)

    def budget(tb):
        return (2 * Bp * Dp * 2          # resident bf16 features, Buffered(1)
                + 2 * 8 * Bp * 4         # label row + log-match row, Buffered(1)
                + 2 * tb * 128 * 4       # label column block (double-buffered)
                + 10 * tb * Bp * 4       # live (TB, Bp) f32 temps in the body
                + (2 << 20))             # headroom

    if B > 128:
        # Shrink TB (halving keeps Bp divisible and bf16-tile alignment) rather
        # than silently clamping the VMEM limit under the real budget.
        while budget(TB) > vmem_cap and TB > 16:
            TB //= 2
    nblocks = Bp // TB
    vmem_limit = int(min(max(budget(TB), 32 * 1024 * 1024), vmem_cap))

    # ---- pad to lane/sublane-aligned shapes -----------------------------------
    v_p = jnp.zeros((Bp, Dp), jnp.bfloat16).at[:B, :D].set(img_bf)
    t_p = jnp.zeros((Bp, Dp), jnp.bfloat16).at[:B, :D].set(txt_bf)
    lab_col = jnp.zeros((Bp, 1), f32).at[:B, :].set(lab)
    lab_row = lab_col.reshape(1, Bp)
    logm = jnp.full((1, Bp), log_eps, f32).at[0, :B].set(log_match_vals)

    kernel = functools.partial(
        sdm_kernel, n_valid=B, block_rows=TB, log_eps=log_eps)

    resident = dict(pipeline_mode=pl.Buffered(1))   # constant block index: no
                                                    # double-buffering needed
    out = pl.pallas_call(
        kernel,
        grid=(nblocks,),
        in_specs=[
            pl.BlockSpec((Bp, Dp), lambda i: (0, 0), **resident),  # image (resident)
            pl.BlockSpec((Bp, Dp), lambda i: (0, 0), **resident),  # text  (resident)
            pl.BlockSpec((TB, 1), lambda i: (i, 0)),               # labels (row block)
            pl.BlockSpec((1, Bp), lambda i: (0, 0), **resident),   # labels (row vec)
            pl.BlockSpec((1, Bp), lambda i: (0, 0), **resident),   # log(1/rowsum+eps)
        ],
        out_specs=pl.BlockSpec((1, 8, 128), lambda i: (i, 0, 0)),
        out_shape=jax.ShapeDtypeStruct((nblocks, 8, 128), f32),
        compiler_params=pltpu.CompilerParams(
            dimension_semantics=("parallel",),
            vmem_limit_bytes=vmem_limit),
    )(v_p, t_p, lab_col, lab_row, logm)

    return jnp.sum(out[:, 0, 0])


def reference_sdm(vision, text, labels, length, epsilon=1e-8,
                  matmul_dtype=jnp.float32, fold_scale=False):
    """Plain-JAX reference mirroring the PyTorch forward.

    matmul_dtype=bfloat16 + fold_scale=True reproduces the kernel's intentional
    numerics (bf16 MXU operands, logit scale folded into the image operand) so
    the kernel can be checked at tight tolerance; the defaults mirror the exact
    f32 PyTorch module.
    """
    logit_scale = jnp.float32(length)
    lab = labels.astype(jnp.float32).reshape(-1, 1)
    lab = ((lab - lab.T) == 0).astype(jnp.float32)
    image_norm = vision / jnp.linalg.norm(vision, axis=1, keepdims=True)
    text_norm = text / jnp.linalg.norm(text, axis=1, keepdims=True)
    if fold_scale:
        image_op = (image_norm * logit_scale).astype(matmul_dtype)
        post_scale = jnp.float32(1.0)
    else:
        image_op = image_norm.astype(matmul_dtype)
        post_scale = logit_scale
    t2i = post_scale * jnp.dot(text_norm.astype(matmul_dtype), image_op.T,
                               preferred_element_type=jnp.float32)
    i2t = t2i.T
    text_proj_image = t2i
    vision_proj_text = i2t
    labels_distribute = lab / jnp.sum(lab, axis=1)   # torch-style broadcast
    i2t_pred = jax.nn.softmax(vision_proj_text, axis=1)
    i2t_loss = i2t_pred * (jax.nn.log_softmax(vision_proj_text, axis=1)
                           - jnp.log(labels_distribute + epsilon))
    t2i_pred = jax.nn.softmax(text_proj_image, axis=1)
    t2i_loss = t2i_pred * (jax.nn.log_softmax(text_proj_image, axis=1)
                           - jnp.log(labels_distribute + epsilon))
    return (jnp.mean(jnp.sum(i2t_loss, axis=1))
            + jnp.mean(jnp.sum(t2i_loss, axis=1)))


if __name__ == "__main__":
    length = 16.0   # module's __init__ arg (logit scale)
    key = jax.random.PRNGKey(0)

    # (B, D) cases: aligned batch, a padded/masked batch, and a multi-row-block
    # batch that exercises the 2-block (dual TensorCore) path.
    for B, D in ((8, 32), (6, 40), (20, 48)):
        key, k1, k2 = jax.random.split(key, 3)
        vision = jax.random.normal(k1, (B, D), dtype=jnp.float32)
        text = jax.random.normal(k2, (B, D), dtype=jnp.float32)
        # person-id style labels: pairs of matching ids, shape (B, 1)
        labels = (jnp.arange(B, dtype=jnp.int32) // 2).astype(jnp.float32).reshape(B, 1)

        loss = jax.block_until_ready(sdm_loss(vision, text, labels, length))

        # Kernel fidelity: same math with bf16 MXU operands and the scale folded
        # into the image operand (tight tolerance).
        ref_bf16 = reference_sdm(vision, text, labels, length,
                                 matmul_dtype=jnp.bfloat16, fold_scale=True)
        assert jnp.allclose(loss, ref_bf16, rtol=1e-2, atol=1e-2), (B, D, loss, ref_bf16)

        # Forward semantics vs the exact-f32 PyTorch module (loose: bf16 drift).
        ref_f32 = reference_sdm(vision, text, labels, length,
                                matmul_dtype=jnp.float32)
        assert jnp.allclose(loss, ref_f32, rtol=1e-1, atol=1e-1), (B, D, loss, ref_f32)

    print("KERNEL_OK")
</pallas_src>

<mosaic_0001>
module attributes {stable_mosaic.version = 11 : i64} {
  func.func @sdm_kernel(%arg0: i32, %arg1: memref<16x128xbf16, #tpu.memory_space<vmem>>, %arg2: memref<16x128xbf16, #tpu.memory_space<vmem>>, %arg3: memref<16x1xf32, #tpu.memory_space<vmem>>, %arg4: memref<1x16xf32, #tpu.memory_space<vmem>>, %arg5: memref<1x16xf32, #tpu.memory_space<vmem>>, %arg6: memref<1x8x128xf32, #tpu.memory_space<vmem>>) attributes {dimension_semantics = [#tpu.dimension_semantics<parallel>], iteration_bounds = array<i64: 1>, scalar_prefetch = 0 : i64, scratch_operands = 0 : i64, tpu.core_type = #tpu.core_type<tc>, window_params = [{pipeline_mode = #tpu.pipeline_mode<synchronous>, transform_indices = @transform_0, window_bounds = array<i64: 16, 128>}, {pipeline_mode = #tpu.pipeline_mode<synchronous>, transform_indices = @transform_1, window_bounds = array<i64: 16, 128>}, {transform_indices = @transform_2, window_bounds = array<i64: 16, 1>}, {pipeline_mode = #tpu.pipeline_mode<synchronous>, transform_indices = @transform_3, window_bounds = array<i64: 1, 16>}, {pipeline_mode = #tpu.pipeline_mode<synchronous>, transform_indices = @transform_4, window_bounds = array<i64: 1, 16>}, {transform_indices = @transform_5, window_bounds = array<i64: 1, 8, 128>}]} {
    %c16_i32 = arith.constant 16 : i32
    %0 = arith.muli %arg0, %c16_i32 : i32
    %1 = tpu.assume_multiple %0, 16 : i32
    %c0 = arith.constant 0 : index
    %c0_0 = arith.constant 0 : index
    %2 = vector.load %arg1[%c0, %c0_0] : memref<16x128xbf16, #tpu.memory_space<vmem>>, vector<16x128xbf16>
    %c0_1 = arith.constant 0 : index
    %c0_2 = arith.constant 0 : index
    %3 = vector.load %arg2[%c0_1, %c0_2] : memref<16x128xbf16, #tpu.memory_space<vmem>>, vector<16x128xbf16>
    %cst = arith.constant dense<0.000000e+00> : vector<16x16xf32>
    %4 = tpu.matmul %2, %3, %cst {dimension_numbers = #tpu.dot_dimension_numbers<[1], [1], [0], [0], [0, 0, 1, 0], [], []>} : vector<16x128xbf16>, vector<16x128xbf16>, vector<16x16xf32> -> vector<16x16xf32>
    %cst_3 = arith.constant dense<0.000000e+00> : vector<16x16xf32>
    %5 = tpu.matmul %3, %2, %cst_3 {dimension_numbers = #tpu.dot_dimension_numbers<[1], [1], [0], [0], [0, 0, 1, 0], [], []>} : vector<16x128xbf16>, vector<16x128xbf16>, vector<16x16xf32> -> vector<16x16xf32>
    %6 = tpu.iota {dimensions = array<i32: 1>} : vector<1x16xi32>
    %c8_i32 = arith.constant 8 : i32
    %7 = vector.broadcast %c8_i32 : i32 to vector<1x16xi32>
    %8 = arith.cmpi slt, %6, %7 : vector<1x16xi32>
    %cst_4 = arith.constant -1.000000e+30 : f32
    %9 = vector.shape_cast %8 : vector<1x16xi1> to vector<1x16xi1>
    %10 = vector.broadcast %9 : vector<1x16xi1> to vector<16x16xi1>
    %11 = vector.broadcast %cst_4 : f32 to vector<16x16xf32>
    %12 = arith.select %10, %4, %11 : vector<16x16xi1>, vector<16x16xf32>
    %cst_5 = arith.constant -1.000000e+30 : f32
    %13 = vector.shape_cast %8 : vector<1x16xi1> to vector<1x16xi1>
    %14 = vector.broadcast %13 : vector<1x16xi1> to vector<16x16xi1>
    %15 = vector.broadcast %cst_5 : f32 to vector<16x16xf32>
    %16 = arith.select %14, %5, %15 : vector<16x16xi1>, vector<16x16xf32>
    %c0_6 = arith.constant 0 : index
    %c0_7 = arith.constant 0 : index
    %17 = vector.load %arg3[%c0_6, %c0_7] : memref<16x1xf32, #tpu.memory_space<vmem>>, vector<16x1xf32>
    %c0_8 = arith.constant 0 : index
    %c0_9 = arith.constant 0 : index
    %18 = vector.load %arg4[%c0_8, %c0_9] : memref<1x16xf32, #tpu.memory_space<vmem>>, vector<1x16xf32>
    %19 = vector.broadcast %17 : vector<16x1xf32> to vector<16x16xf32>
    %20 = vector.broadcast %18 : vector<1x16xf32> to vector<16x16xf32>
    %21 = arith.cmpf oeq, %19, %20 : vector<16x16xf32>
    %c0_10 = arith.constant 0 : index
    %c0_11 = arith.constant 0 : index
    %22 = vector.load %arg5[%c0_10, %c0_11] : memref<1x16xf32, #tpu.memory_space<vmem>>, vector<1x16xf32>
    %cst_12 = arith.constant -18.420681 : f32
    %23 = vector.shape_cast %22 : vector<1x16xf32> to vector<1x16xf32>
    %24 = vector.broadcast %23 : vector<1x16xf32> to vector<16x16xf32>
    %25 = vector.broadcast %cst_12 : f32 to vector<16x16xf32>
    %26 = arith.select %21, %24, %25 : vector<16x16xi1>, vector<16x16xf32>
    %cst_13 = arith.constant dense<0xFF800000> : vector<16xf32>
    %27 = vector.multi_reduction <maximumf>, %12, %cst_13 [1] : vector<16x16xf32> to vector<16xf32>
    %28 = vector.shape_cast %27 : vector<16xf32> to vector<16x1xf32>
    %29 = vector.broadcast %28 : vector<16x1xf32> to vector<16x16xf32>
    %30 = arith.subf %12, %29 : vector<16x16xf32>
    %31 = math.exp %30 : vector<16x16xf32>
    %cst_14 = arith.constant dense<0.000000e+00> : vector<16xf32>
    %32 = vector.multi_reduction <add>, %31, %cst_14 [1] : vector<16x16xf32> to vector<16xf32>
    %33 = vector.shape_cast %32 : vector<16xf32> to vector<16x1xf32>
    %34 = arith.subf %30, %26 : vector<16x16xf32>
    %35 = arith.mulf %31, %34 : vector<16x16xf32>
    %cst_15 = arith.constant dense<0.000000e+00> : vector<16xf32>
    %36 = vector.multi_reduction <add>, %35, %cst_15 [1] : vector<16x16xf32> to vector<16xf32>
    %37 = vector.shape_cast %36 : vector<16xf32> to vector<16x1xf32>
    %38 = arith.divf %37, %33 : vector<16x1xf32>
    %39 = math.log %33 : vector<16x1xf32>
    %40 = arith.subf %38, %39 : vector<16x1xf32>
    %cst_16 = arith.constant dense<0xFF800000> : vector<16xf32>
    %41 = vector.multi_reduction <maximumf>, %16, %cst_16 [1] : vector<16x16xf32> to vector<16xf32>
    %42 = vector.shape_cast %41 : vector<16xf32> to vector<16x1xf32>
    %43 = vector.broadcast %42 : vector<16x1xf32> to vector<16x16xf32>
    %44 = arith.subf %16, %43 : vector<16x16xf32>
    %45 = math.exp %44 : vector<16x16xf32>
    %cst_17 = arith.constant dense<0.000000e+00> : vector<16xf32>
    %46 = vector.multi_reduction <add>, %45, %cst_17 [1] : vector<16x16xf32> to vector<16xf32>
    %47 = vector.shape_cast %46 : vector<16xf32> to vector<16x1xf32>
    %48 = arith.subf %44, %26 : vector<16x16xf32>
    %49 = arith.mulf %45, %48 : vector<16x16xf32>
    %cst_18 = arith.constant dense<0.000000e+00> : vector<16xf32>
    %50 = vector.multi_reduction <add>, %49, %cst_18 [1] : vector<16x16xf32> to vector<16xf32>
    %51 = vector.shape_cast %50 : vector<16xf32> to vector<16x1xf32>
    %52 = arith.divf %51, %47 : vector<16x1xf32>
    %53 = math.log %47 : vector<16x1xf32>
    %54 = arith.subf %52, %53 : vector<16x1xf32>
    %55 = arith.addf %40, %54 : vector<16x1xf32>
    %56 = tpu.iota {dimensions = array<i32: 0>} : vector<16x1xi32>
    %57 = vector.broadcast %1 : i32 to vector<16x1xi32>
    %58 = arith.addi %56, %57 : vector<16x1xi32>
    %c8_i32_19 = arith.constant 8 : i32
    %59 = vector.broadcast %c8_i32_19 : i32 to vector<16x1xi32>
    %60 = arith.cmpi slt, %58, %59 : vector<16x1xi32>
    %61 = arith.extui %60 : vector<16x1xi1> to vector<16x1xi32>
    %62 = arith.sitofp %61 : vector<16x1xi32> to vector<16x1xf32>
    %63 = arith.mulf %55, %62 : vector<16x1xf32>
    %64 = vector.shape_cast %63 : vector<16x1xf32> to vector<1x16x1xf32>
    %cst_20 = arith.constant dense<0.000000e+00> : vector<1xf32>
    %65 = vector.multi_reduction <add>, %64, %cst_20 [1, 2] : vector<1x16x1xf32> to vector<1xf32>
    %66 = vector.shape_cast %65 : vector<1xf32> to vector<1x1x1xf32>
    %67 = vector.extract %66[0, 0, 0] : f32 from vector<1x1x1xf32>
    %cst_21 = arith.constant 8.000000e+00 : f32
    %68 = arith.divf %67, %cst_21 : f32
    %69 = vector.broadcast %68 : f32 to vector<1x8x128xf32>
    %c0_22 = arith.constant 0 : index
    %c0_23 = arith.constant 0 : index
    %c0_24 = arith.constant 0 : index
    %70 = vector.load %arg6[%c0_22, %c0_23, %c0_24] : memref<1x8x128xf32, #tpu.memory_space<vmem>>, vector<1x8x128xf32>
    tpu.vector_store %arg6[%c0_22, %c0_23, %c0_24], %69 {strides = array<i32>} : memref<1x8x128xf32, #tpu.memory_space<vmem>>, vector<1x8x128xf32>,
    return
  }
  func.func @transform_0(%arg0: i32) -> (i32, i32) {
    %c0_i32 = arith.constant 0 : i32
    %c0_i32_0 = arith.constant 0 : i32
    %c0_i32_1 = arith.constant 0 : i32
    return %c0_i32, %c0_i32_0 : i32, i32
  }
  func.func @transform_1(%arg0: i32) -> (i32, i32) {
    %c0_i32 = arith.constant 0 : i32
    %c0_i32_0 = arith.constant 0 : i32
    %c0_i32_1 = arith.constant 0 : i32
    return %c0_i32, %c0_i32_0 : i32, i32
  }
  func.func @transform_2(%arg0: i32) -> (i32, i32) {
    %c0_i32 = arith.constant 0 : i32
    %c0_i32_0 = arith.constant 0 : i32
    return %arg0, %c0_i32 : i32, i32
  }
  func.func @transform_3(%arg0: i32) -> (i32, i32) {
    %c0_i32 = arith.constant 0 : i32
    %c0_i32_0 = arith.constant 0 : i32
    %c0_i32_1 = arith.constant 0 : i32
    return %c0_i32, %c0_i32_0 : i32, i32
  }
  func.func @transform_4(%arg0: i32) -> (i32, i32) {
    %c0_i32 = arith.constant 0 : i32
    %c0_i32_0 = arith.constant 0 : i32
    %c0_i32_1 = arith.constant 0 : i32
    return %c0_i32, %c0_i32_0 : i32, i32
  }
  func.func @transform_5(%arg0: i32) -> (i32, i32, i32) {
    %c0_i32 = arith.constant 0 : i32
    %c0_i32_0 = arith.constant 0 : i32
    %c0_i32_1 = arith.constant 0 : i32
    return %arg0, %c0_i32, %c0_i32_0 : i32, i32, i32
  }
}

</mosaic_0001>

<llo_original>
// kernel: tpu_custom_call.1
$region0: #{tpu_custom_call.1}
  #allocation0 [shape = 'u32[]', space=smem, size = 0x4, offset = 0x4, fixed_abs, tag = 'smem constant byte address 0x4 - core index']
  #allocation1 [shape = 'u32[144,128]{1,0:T(1,128)}', space=vmem, size = 0x12000, scoped, tag = 'internal scratch']
  %s0 = inlined_call_operand.vmem [shape: bf16[16,128], index: 0, kind: input, shape index: {}]
  %s1 = inlined_call_operand.vmem [shape: bf16[16,128], index: 1, kind: input, shape index: {}]
  %s2 = inlined_call_operand.vmem [shape: f32[16,1], index: 2, kind: input, shape index: {}]
  %s3 = inlined_call_operand.vmem [shape: f32[1,16], index: 3, kind: input, shape index: {}]
  %s4 = inlined_call_operand.vmem [shape: f32[1,16], index: 4, kind: input, shape index: {}]
  %s5 = inlined_call_operand.hbm [shape: f32[1,8,128], index: 5, kind: output, shape index: {}]
  %s6 = sld [smem:[#allocation0]]
  $region30: #{tpu_custom_call.1} parent=0
    _
  %s8 = ssub.s32 1, %s6
  %s9 = scalar_select 0, %s8, %s6
  $region1: #{tpu_custom_call.1} parent=0
    #allocation2 [shape = 'u8[4096]{0}', space=vmem, size = 0x1000, scoped, tag = 'output window, operand 0, single buffered']
    #allocation3 [shape = 's32[1]{0}', space=sflag, size = 0x4, scoped, tag = 'scoped memory for tpu_custom_call.1']
    %10 = vsyncpa [#allocation3], 0
    // Predicated region
    $region2: #{tpu_custom_call.1} parent=1 // pred_check
      _
    $region3: #{tpu_custom_call.1} parent=1 // pred_check_branch
      %12 = sbr.rel (0) target = $region5
    $region4: #{tpu_custom_call.1} parent=1 // pred_region
      _
    $region5: #{tpu_custom_call.1} parent=1 // pred_fallthru
      _
    // Predicated region
    $region6: #{tpu_custom_call.1} parent=1 // pred_check
      _
    $region7: #{tpu_custom_call.1} parent=1 // pred_check_branch
      %14 = sbr.rel (0) target = $region9
    $region8: #{tpu_custom_call.1} parent=1 // pred_region
      _
    $region9: #{tpu_custom_call.1} parent=1 // pred_fallthru
      _
    // Predicated region
    $region10: #{tpu_custom_call.1} parent=1 // pred_check
      _
    $region11: #{tpu_custom_call.1} parent=1 // pred_check_branch
      %16 = sbr.rel (0) target = $region13
    $region12: #{tpu_custom_call.1} parent=1 // pred_region
      _
    $region13: #{tpu_custom_call.1} parent=1 // pred_fallthru
      _
    // Predicated region
    $region14: #{tpu_custom_call.1} parent=1 // pred_check
      _
    $region15: #{tpu_custom_call.1} parent=1 // pred_check_branch
      %18 = sbr.rel (0) target = $region17
    $region16: #{tpu_custom_call.1} parent=1 // pred_region
      _
    $region17: #{tpu_custom_call.1} parent=1 // pred_fallthru
      _
    // Predicated region
    $region18: #{tpu_custom_call.1} parent=1 // pred_check
      _
    $region19: #{tpu_custom_call.1} parent=1 // pred_check_branch
      %20 = sbr.rel (0) target = $region21
    $region20: #{tpu_custom_call.1} parent=1 // pred_region
      _
    $region21: #{tpu_custom_call.1} parent=1 // pred_fallthru
      _
    %s22 = smul.u32 0, 16
    %v23 = vld [vmem:[%s0] sm:$0xf]
    %v24 = vld [vmem:[%s0 + $0x4] sm:$0xf]
    %v25 = vld [vmem:[%s1] sm:$0xf]
    %v26 = vld [vmem:[%s1 + $0x4] sm:$0xf]
    %v29 = vunpack.c.l.b16 %v23
    %v30 = vunpack.c.l.b16 %v24
    %v31 = vpack.c.b16 %v30, %v29
    %v35 = vunpack.c.l.b16 %v25
    %v36 = vunpack.c.l.b16 %v26
    %v37 = vpack.c.b16 %v36, %v35
    %39 = vmatprep.subr.bf16.mxu0 0
    %40 = vmatpush1.bf16.xpose.msra.mxu0 %v37
    %41 = vmatprep.subr.bf16.mxu0 0
    %42 = vmatpush1.bf16.xpose.msra.mxu0 0
    %43 = vmatprep.subr.bf16.mxu0 0
    %44 = vmatpush1.bf16.xpose.msra.mxu0 0
    %45 = vmatprep.subr.bf16.mxu0 0
    %46 = vmatpush1.bf16.xpose.msra.mxu0 0
    %47 = vmatprep.subr.bf16.mxu0 0
    %48 = vmatpush1.bf16.xpose.msra.mxu0 0
    %49 = vmatprep.subr.bf16.mxu0 0
    %50 = vmatpush1.bf16.xpose.msra.mxu0 0
    %51 = vmatprep.subr.bf16.mxu0 0
    %52 = vmatpush1.bf16.xpose.msra.mxu0 0
    %53 = vmatprep.subr.bf16.mxu0 0
    %54 = vmatpush1.bf16.xpose.msra.mxu0 0
    %55 = vmatprep.subr.bf16.mxu0 0
    %56 = vmatpush1.bf16.xpose.msra.mxu0 0
    %57 = vmatprep.subr.bf16.mxu0 0
    %58 = vmatpush1.bf16.xpose.msra.mxu0 0
    %59 = vmatprep.subr.bf16.mxu0 0
    %60 = vmatpush1.bf16.xpose.msra.mxu0 0
    %61 = vmatprep.subr.bf16.mxu0 0
    %62 = vmatpush1.bf16.xpose.msra.mxu0 0
    %63 = vmatprep.subr.bf16.mxu0 0
    %64 = vmatpush1.bf16.xpose.msra.mxu0 0
    %65 = vmatprep.subr.bf16.mxu0 0
    %66 = vmatpush1.bf16.xpose.msra.mxu0 0
    %67 = vmatprep.subr.bf16.mxu0 0
    %68 = vmatpush1.bf16.xpose.msra.mxu0 0
    %69 = vmatprep.subr.bf16.mxu0 0
    %70 = vmatpush1.bf16.xpose.msra.mxu0 0
    %71 = vmatprep.mubr.bf16.mxu0 0
    %72 = vmatmul.mubr.bf16.gmra.mrb[0].mxu0 %v31
    %v73 = vpop.f32.mrb[0].mxu0
    %v74 = vadd.f32 0.0, %v73
    %v75 = vpop.f32.mrb[0].mxu0
    %v76 = vpop.f32.mrb[0].mxu0
    %v77 = vadd.f32 0.0, %v76
    %v78 = vpop.f32.mrb[0].mxu0
    %79 = vdwg.mxu0
    %80 = vmatprep.subr.bf16.mxu0 0
    %81 = vmatpush1.bf16.xpose.msra.mxu0 %v31
    %82 = vmatprep.subr.bf16.mxu0 0
    %83 = vmatpush1.bf16.xpose.msra.mxu0 0
    %84 = vmatprep.subr.bf16.mxu0 0
    %85 = vmatpush1.bf16.xpose.msra.mxu0 0
    %86 = vmatprep.subr.bf16.mxu0 0
    %87 = vmatpush1.bf16.xpose.msra.mxu0 0
    %88 = vmatprep.subr.bf16.mxu0 0
    %89 = vmatpush1.bf16.xpose.msra.mxu0 0
    %90 = vmatprep.subr.bf16.mxu0 0
    %91 = vmatpush1.bf16.xpose.msra.mxu0 0
    %92 = vmatprep.subr.bf16.mxu0 0
    %93 = vmatpush1.bf16.xpose.msra.mxu0 0
    %94 = vmatprep.subr.bf16.mxu0 0
    %95 = vmatpush1.bf16.xpose.msra.mxu0 0
    %96 = vmatprep.subr.bf16.mxu0 0
    %97 = vmatpush1.bf16.xpose.msra.mxu0 0
    %98 = vmatprep.subr.bf16.mxu0 0
    %99 = vmatpush1.bf16.xpose.msra.mxu0 0
    %100 = vmatprep.subr.bf16.mxu0 0
    %101 = vmatpush1.bf16.xpose.msra.mxu0 0
    %102 = vmatprep.subr.bf16.mxu0 0
    %103 = vmatpush1.bf16.xpose.msra.mxu0 0
    %104 = vmatprep.subr.bf16.mxu0 0
    %105 = vmatpush1.bf16.xpose.msra.mxu0 0
    %106 = vmatprep.subr.bf16.mxu0 0
    %107 = vmatpush1.bf16.xpose.msra.mxu0 0
    %108 = vmatprep.subr.bf16.mxu0 0
    %109 = vmatpush1.bf16.xpose.msra.mxu0 0
    %110 = vmatprep.subr.bf16.mxu0 0
    %111 = vmatpush1.bf16.xpose.msra.mxu0 0
    %112 = vmatprep.mubr.bf16.mxu0 0
    %113 = vmatmul.mubr.bf16.gmra.mrb[0].mxu0 %v37
    %v114 = vpop.f32.mrb[0].mxu0
    %v115 = vadd.f32 0.0, %v114
    %v116 = vpop.f32.mrb[0].mxu0
    %v117 = vpop.f32.mrb[0].mxu0
    %v118 = vadd.f32 0.0, %v117
    %v119 = vpop.f32.mrb[0].mxu0
    %120 = vdwg.mxu0
    %v121 = vlaneseq
    %v122 = vand.u32 %v121, 127
    %vm123 = vcmp.lt.s32.totalorder %v122, 8
    %v124 = vsel %vm123, 1, 0
    %vm125 = vcmp.eq.s32.totalorder %v124, 1
    %v126 = vsel %vm125, %v74, -1e+30
    %v127 = vsel %vm125, %v77, -1e+30
    %v128 = vsel %vm125, %v115, -1e+30
    %v129 = vsel %vm125, %v118, -1e+30
    %v130 = vld [vmem:[%s2] sm:$0xff]
    %v131 = vld [vmem:[%s2 + $0x8] sm:$0xff]
    %v132 = vld [vmem:[%s3] sm:$0x1]
    %134 = vset.pattern.permute.xlu0 0
    %135 = vperm.xlu0 %134, %v130
    %v136 = vpop.permute.xlu0 %135
    %139 = vset.pattern.permute.xlu0 0
    %140 = vperm.xlu0 %139, %v131
    %v141 = vpop.permute.xlu0 %140
    %v144 = vlaneseq
    %v145 = vshrl.u32 %v144, 7
    %v146 = vsub.s32 0, %v145
    %v147 = vrot.slane %v132, %v146
    %vm149 = vcmp.eq.f32.partialorder %v136, %v147
    %vm150 = vcmp.eq.f32.partialorder %v141, %v147
    %v151 = vld [vmem:[%s4] sm:$0x1]
    %v153 = vlaneseq
    %v154 = vshrl.u32 %v153, 7
    %v155 = vsub.s32 0, %v154
    %v156 = vrot.slane %v151, %v155
    %v158 = vsel %vm149, %v156, -18.420681
    %v159 = vsel %vm150, %v156, -18.420681
    %vm160 = vcmask 130048
    %v161 = vsel %vm160, %v126, -inf
    %162 = vmax.xlane.f32.xlu0 %v161
    %v163 = vpop.xlane.xlu0 %162
    %v164 = vsel %vm160, %v127, -inf
    %165 = vmax.xlane.f32.xlu0 %v164
    %v166 = vpop.xlane.xlu0 %165
    %v167 = vsub.f32 %v126, %v163
    %v168 = vsub.f32 %v127, %v166
    %v169 = vmul.f32 %v167, 1.442695
    %v170 = vpow.pop %v169
    %v171 = vmul.f32 %v168, 1.442695
    %v172 = vpow.pop %v171
    %v173 = vsel %vm160, %v170, 0.0
    %174 = vadd.xlane.f32.xlu0 %v173
    %v175 = vpop.xlane.xlu0 %174
    %v176 = vsel %vm160, %v172, 0.0
    %177 = vadd.xlane.f32.xlu0 %v176
    %v178 = vpop.xlane.xlu0 %177
    %v179 = vsub.f32 %v167, %v158
    %v180 = vsub.f32 %v168, %v159
    %v181 = vmul.f32 %v170, %v179
    %v182 = vmul.f32 %v172, %v180
    %v183 = vsel %vm160, %v181, 0.0
    %184 = vadd.xlane.f32.xlu0 %v183
    %v185 = vpop.xlane.xlu0 %184
    %v186 = vsel %vm160, %v182, 0.0
    %187 = vadd.xlane.f32.xlu0 %v186
    %v188 = vpop.xlane.xlu0 %187
    %v189 = vrcp.pop %v175
    %v190 = vmul.f32 %v185, %v189
    %v191 = vrcp.pop %v178
    %v192 = vmul.f32 %v188, %v191
    %v193 = vlog2.pop %v175
    %v194 = vmul.f32 %v193, 0.6931472
    %v195 = vlog2.pop %v178
    %v196 = vmul.f32 %v195, 0.6931472
    %v197 = vsub.f32 %v190, %v194
    %v198 = vsub.f32 %v192, %v196
    %v199 = vsel %vm160, %v128, -inf
    %200 = vmax.xlane.f32.xlu0 %v199
    %v201 = vpop.xlane.xlu0 %200
    %v202 = vsel %vm160, %v129, -inf
    %203 = vmax.xlane.f32.xlu0 %v202
    %v204 = vpop.xlane.xlu0 %203
    %v205 = vsub.f32 %v128, %v201
    %v206 = vsub.f32 %v129, %v204
    %v207 = vmul.f32 %v205, 1.442695
    %v208 = vpow.pop %v207
    %v209 = vmul.f32 %v206, 1.442695
    %v210 = vpow.pop %v209
    %v211 = vsel %vm160, %v208, 0.0
    %212 = vadd.xlane.f32.xlu0 %v211
    %v213 = vpop.xlane.xlu0 %212
    %v214 = vsel %vm160, %v210, 0.0
    %215 = vadd.xlane.f32.xlu0 %v214
    %v216 = vpop.xlane.xlu0 %215
    %v217 = vsub.f32 %v205, %v158
    %v218 = vsub.f32 %v206, %v159
    %v219 = vmul.f32 %v208, %v217
    %v220 = vmul.f32 %v210, %v218
    %v221 = vsel %vm160, %v219, 0.0
    %222 = vadd.xlane.f32.xlu0 %v221
    %v223 = vpop.xlane.xlu0 %222
    %v224 = vsel %vm160, %v220, 0.0
    %225 = vadd.xlane.f32.xlu0 %v224
    %v226 = vpop.xlane.xlu0 %225
    %v227 = vrcp.pop %v213
    %v228 = vmul.f32 %v223, %v227
    %v229 = vrcp.pop %v216
    %v230 = vmul.f32 %v226, %v229
    %v231 = vlog2.pop %v213
    %v232 = vmul.f32 %v231, 0.6931472
    %v233 = vlog2.pop %v216
    %v234 = vmul.f32 %v233, 0.6931472
    %v235 = vsub.f32 %v228, %v232
    %v236 = vsub.f32 %v230, %v234
    %v237 = vadd.f32 %v197, %v235
    %v238 = vadd.f32 %v198, %v236
    %v239 = vlaneseq
    %v240 = vshrl.u32 %v239, 7
    %v241 = vadd.s32 %v240, 8
    %v242 = vstv %s22
    %v243 = vadd.s32 %v240, %v242
    %v244 = vadd.s32 %v241, %v242
    %vm245 = vcmp.lt.s32.totalorder %v243, 8
    %vm246 = vcmp.lt.s32.totalorder %v244, 8
    %v247 = vsel %vm245, 1, 0
    %v248 = vsel %vm246, 1, 0
    %v249 = vcvt.s32.f32 %v247
    %v250 = vcvt.s32.f32 %v248
    %v251 = vmul.f32 %v237, %v249
    %v252 = vmul.f32 %v238, %v250
    %vm253 = vcmask 7168
    %v254 = vsel %vm253, %v251, 0.0
    %v255 = vsel %vm253, %v252, 0.0
    %v256 = vadd.f32 %v254, %v255
    %257 = vadd.xlane.f32.xlu0 %v256
    %v258 = vpop.xlane.xlu0 %257
    %v259 = vrot.slane %v258, 4
    %v260 = vadd.f32 %v258, %v259
    %v261 = vrot.slane %v260, 2
    %v262 = vadd.f32 %v260, %v261
    %v263 = vrot.slane %v262, 1
    %v264 = vadd.f32 %v262, %v263
    %s265 = vtos %v264
    %v266 = vrcp.pop 8.0
    %s267 = vtos %v266
    %s268 = smul.f32 %s265, %s267
    %v269 = vstv %s268
    %270 = vst [vmem:[#allocation2] sm:$0xff] %v269
    // Predicated region
    $region22: #{tpu_custom_call.1} parent=1 // pred_check
      _
    $region23: #{tpu_custom_call.1} parent=1 // pred_check_branch
      %272 = sbr.rel (0) target = $region25
    $region24: #{tpu_custom_call.1} parent=1 // pred_region
      %s274 = ssub.s32 128, 128
      %275 = vsyncadd [#allocation3], %s274
      %s277 = sshll.u32 [#allocation2], 4
      %s278 = int_to_ptr.vmem [resolvable:$true] %s277
      %280 = dma.vmem_to_hbm [thread:$0]  %s278, 128, %s5, [#allocation3]
    $region25: #{tpu_custom_call.1} parent=1 // pred_fallthru
      _
    // Predicated region
    $region26: #{tpu_custom_call.1} parent=1 // pred_check
      _
    $region27: #{tpu_custom_call.1} parent=1 // pred_check_branch
      %282 = sbr.rel (0) target = $region29
    $region28: #{tpu_custom_call.1} parent=1 // pred_region
      %283 = dma.done [#allocation3], 128
    $region29: #{tpu_custom_call.1} parent=1 // pred_fallthru
      _
    %284 = vsyncpa [#allocation3], 1

</llo_original>
